<compile_context>
chip_gen: v7x
topology: tpu7x:2x2x1
jax: 0.10.0
libtpu: 0.0.40
codegen_flags: <defaults>
</compile_context>

<pallas_src>
import jax
import jax.numpy as jnp
from jax.experimental import pallas as pl
from jax.experimental.pallas import tpu as pltpu


def generator_kernel(z_ref, ij_ref,
                     w1z_ref, wef_ref, b1_ref,
                     w2_ref, b2_ref,
                     w3_ref, b3_ref,
                     out_ref):
    # Layer 1 on concat([z, embedding(ij)]) with the embedding folded in:
    #   h1 = z @ W1_z + ij @ (We @ W1_e) + (b1 + be @ W1_e)
    h1 = (jnp.dot(z_ref[...], w1z_ref[...], preferred_element_type=jnp.float32)
          + jnp.dot(ij_ref[...], wef_ref[...], preferred_element_type=jnp.float32)
          + b1_ref[...])
    h1 = jnp.maximum(h1, 0.0)

    # Layer 2 + ReLU (bias/ReLU in f32; cast only the MXU operand).
    h2 = jnp.dot(h1.astype(w2_ref.dtype), w2_ref[...],
                 preferred_element_type=jnp.float32) + b2_ref[...]
    h2 = jnp.maximum(h2, 0.0)

    # Output layer (no activation): (TM, 2*l)
    out_ref[...] = (jnp.dot(h2.astype(w3_ref.dtype), w3_ref[...],
                            preferred_element_type=jnp.float32)
                    + b3_ref[...]).astype(out_ref.dtype)


def generator_forward(z, ij, params, Nr, Nt, l, *,
                      block_b=128, compute_dtype=jnp.bfloat16):
    """Runs the Pallas kernel and does the complex-view reshape glue."""
    B, z_dim = z.shape
    num_pairs = ij.shape[1]
    hidden_dim = params["w1z"].shape[1]
    out_dim = 2 * l

    # ---- algebraic fold of the embedding linear into layer 1 (f32, exact) ----
    wef = params["we"] @ params["w1e"]                    # (num_pairs, hidden)
    b1f = params["b1"] + params["be"] @ params["w1e"]     # (1, hidden)

    # ---- dtype layout: bf16 MXU operands, f32 biases / accumulation ----------
    z_c = z.astype(compute_dtype)
    ij_c = ij.astype(compute_dtype)
    w1z = params["w1z"].astype(compute_dtype)
    wef = wef.astype(compute_dtype)
    w2 = params["w2"].astype(compute_dtype)
    w3 = params["w3"].astype(compute_dtype)
    b1f = b1f.astype(jnp.float32)
    b2 = params["b2"].astype(jnp.float32)
    b3 = params["b3"].astype(jnp.float32)

    # ---- batch tiling: grid over B, weights VMEM-resident ---------------------
    tm = max(8, (min(block_b, B) // 8) * 8)          # sublane-aligned batch tile
    B_pad = ((B + tm - 1) // tm) * tm
    if B_pad != B:
        z_c = jnp.pad(z_c, ((0, B_pad - B), (0, 0)))
        ij_c = jnp.pad(ij_c, ((0, B_pad - B), (0, 0)))
    grid = (B_pad // tm,)

    batch_spec = lambda d: pl.BlockSpec((tm, d), lambda i: (i, 0))
    resident = lambda s: pl.BlockSpec(s, lambda i: (0, 0))   # constant -> no re-DMA

    out_flat = pl.pallas_call(
        generator_kernel,
        out_shape=jax.ShapeDtypeStruct((B_pad, out_dim), jnp.float32),
        grid=grid,
        in_specs=[
            batch_spec(z_dim),                    # z
            batch_spec(num_pairs),                # ij (one-hot or arbitrary)
            resident((z_dim, hidden_dim)),        # W1_z
            resident((num_pairs, hidden_dim)),    # We @ W1_e   (folded)
            resident((1, hidden_dim)),            # b1 + be @ W1_e (folded)
            resident((hidden_dim, hidden_dim)),   # W2
            resident((1, hidden_dim)),            # b2
            resident((hidden_dim, out_dim)),      # W3
            resident((1, out_dim)),               # b3
        ],
        out_specs=batch_spec(out_dim),
        compiler_params=pltpu.CompilerParams(
            dimension_semantics=("parallel",)),
    )(z_c, ij_c, w1z, wef, b1f, w2, b2, w3, b3)

    out_flat = out_flat[:B]

    # torch.view_as_complex(output.view(-1, l, 2)).view(-1, Nr, Nt, l)
    out_pairs = out_flat.reshape(-1, l, 2)
    cplx = out_pairs[..., 0] + 1j * out_pairs[..., 1]        # complex64
    return cplx.reshape(-1, Nr, Nt, l)


def reference_forward(z, ij, params, Nr, Nt, l):
    """Pure-JAX f32 reference matching the PyTorch module."""
    emb = ij @ params["we"] + params["be"]
    x = jnp.concatenate([z, emb], axis=1)
    w1 = jnp.concatenate([params["w1z"], params["w1e"]], axis=0)
    h1 = jnp.maximum(x @ w1 + params["b1"], 0.0)
    h2 = jnp.maximum(h1 @ params["w2"] + params["b2"], 0.0)
    out = h2 @ params["w3"] + params["b3"]
    out_pairs = out.reshape(-1, l, 2)
    cplx = out_pairs[..., 0] + 1j * out_pairs[..., 1]
    return cplx.reshape(-1, Nr, Nt, l)


def init_params(key, num_pairs, z_dim, embed_dim, hidden_dim, l):
    """Deterministic synthetic parameters (uniform, torch-Linear-like fan-in scaling)."""
    def lin(k, fan_in, fan_out):
        kw, kb = jax.random.split(k)
        bound = 1.0 / jnp.sqrt(fan_in)
        w = jax.random.uniform(kw, (fan_in, fan_out), jnp.float32, -bound, bound)
        b = jax.random.uniform(kb, (1, fan_out), jnp.float32, -bound, bound)
        return w, b

    k_e, k1, k2, k3 = jax.random.split(key, 4)
    we, be = lin(k_e, num_pairs, embed_dim)
    w1, b1 = lin(k1, z_dim + embed_dim, hidden_dim)
    w2, b2 = lin(k2, hidden_dim, hidden_dim)
    w3, b3 = lin(k3, hidden_dim, 2 * l)
    return {
        "we": we, "be": be,
        "w1z": w1[:z_dim, :], "w1e": w1[z_dim:, :], "b1": b1,   # concat fold split
        "w2": w2, "b2": b2,
        "w3": w3, "b3": b3,
    }


if __name__ == "__main__":
    # Small shapes consistent with the module's forward semantics.
    Nr, Nt, l = 2, 2, 4
    z_dim, embed_dim, hidden_dim = 8, 4, 32
    num_pairs = Nr * Nt
    batch = 32                     # multiple of Nr*Nt for the final complex view

    key = jax.random.PRNGKey(0)
    k_z, k_ij = jax.random.split(key)

    z = jax.random.normal(k_z, (batch, z_dim), jnp.float32)
    ij_idx = jax.random.randint(k_ij, (batch,), 0, num_pairs)
    ij = jax.nn.one_hot(ij_idx, num_pairs, dtype=jnp.float32)

    params = init_params(jax.random.PRNGKey(42), num_pairs, z_dim,
                         embed_dim, hidden_dim, l)

    # block_b=8 exercises a multi-step batch grid with VMEM-resident weights.
    out = generator_forward(z, ij, params, Nr, Nt, l, block_b=8)
    out = jax.block_until_ready(out)

    assert out.shape == (batch // (Nr * Nt), Nr, Nt, l), out.shape
    assert jnp.iscomplexobj(out)

    # Correctness vs. the f32 reference (bf16 MXU operands => loose tolerance).
    ref = reference_forward(z, ij, params, Nr, Nt, l)
    max_err = float(jnp.max(jnp.abs(out - ref)))
    assert jnp.allclose(out, ref, atol=5e-2, rtol=5e-2), max_err

    print("KERNEL_OK")
</pallas_src>

<mosaic_0001>
module attributes {stable_mosaic.version = 11 : i64} {
  func.func @generator_kernel(%arg0: i32, %arg1: memref<8x8xbf16, #tpu.memory_space<vmem>>, %arg2: memref<8x4xbf16, #tpu.memory_space<vmem>>, %arg3: memref<8x32xbf16, #tpu.memory_space<vmem>>, %arg4: memref<4x32xbf16, #tpu.memory_space<vmem>>, %arg5: memref<1x32xf32, #tpu.memory_space<vmem>>, %arg6: memref<32x32xbf16, #tpu.memory_space<vmem>>, %arg7: memref<1x32xf32, #tpu.memory_space<vmem>>, %arg8: memref<32x8xbf16, #tpu.memory_space<vmem>>, %arg9: memref<1x8xf32, #tpu.memory_space<vmem>>, %arg10: memref<8x8xf32, #tpu.memory_space<vmem>>) attributes {dimension_semantics = [#tpu.dimension_semantics<parallel>], iteration_bounds = array<i64: 4>, scalar_prefetch = 0 : i64, scratch_operands = 0 : i64, tpu.core_type = #tpu.core_type<tc>, window_params = [{transform_indices = @transform_0, window_bounds = array<i64: 8, 8>}, {transform_indices = @transform_1, window_bounds = array<i64: 8, 4>}, {pipeline_mode = #tpu.pipeline_mode<synchronous>, transform_indices = @transform_2, window_bounds = array<i64: 8, 32>}, {pipeline_mode = #tpu.pipeline_mode<synchronous>, transform_indices = @transform_3, window_bounds = array<i64: 4, 32>}, {pipeline_mode = #tpu.pipeline_mode<synchronous>, transform_indices = @transform_4, window_bounds = array<i64: 1, 32>}, {pipeline_mode = #tpu.pipeline_mode<synchronous>, transform_indices = @transform_5, window_bounds = array<i64: 32, 32>}, {pipeline_mode = #tpu.pipeline_mode<synchronous>, transform_indices = @transform_6, window_bounds = array<i64: 1, 32>}, {pipeline_mode = #tpu.pipeline_mode<synchronous>, transform_indices = @transform_7, window_bounds = array<i64: 32, 8>}, {pipeline_mode = #tpu.pipeline_mode<synchronous>, transform_indices = @transform_8, window_bounds = array<i64: 1, 8>}, {transform_indices = @transform_9, window_bounds = array<i64: 8, 8>}]} {
    %c0 = arith.constant 0 : index
    %c0_0 = arith.constant 0 : index
    %0 = vector.load %arg1[%c0, %c0_0] : memref<8x8xbf16, #tpu.memory_space<vmem>>, vector<8x8xbf16>
    %c0_1 = arith.constant 0 : index
    %c0_2 = arith.constant 0 : index
    %1 = vector.load %arg3[%c0_1, %c0_2] : memref<8x32xbf16, #tpu.memory_space<vmem>>, vector<8x32xbf16>
    %cst = arith.constant dense<0.000000e+00> : vector<8x32xf32>
    %2 = tpu.matmul %0, %1, %cst {dimension_numbers = #tpu.dot_dimension_numbers<[1], [0], [0], [1], [0, 0, 1, 1], [], []>} : vector<8x8xbf16>, vector<8x32xbf16>, vector<8x32xf32> -> vector<8x32xf32>
    %c0_3 = arith.constant 0 : index
    %c0_4 = arith.constant 0 : index
    %3 = vector.load %arg2[%c0_3, %c0_4] : memref<8x4xbf16, #tpu.memory_space<vmem>>, vector<8x4xbf16>
    %c0_5 = arith.constant 0 : index
    %c0_6 = arith.constant 0 : index
    %4 = vector.load %arg4[%c0_5, %c0_6] : memref<4x32xbf16, #tpu.memory_space<vmem>>, vector<4x32xbf16>
    %cst_7 = arith.constant dense<0.000000e+00> : vector<8x32xf32>
    %5 = tpu.matmul %3, %4, %cst_7 {dimension_numbers = #tpu.dot_dimension_numbers<[1], [0], [0], [1], [0, 0, 1, 1], [], []>} : vector<8x4xbf16>, vector<4x32xbf16>, vector<8x32xf32> -> vector<8x32xf32>
    %6 = arith.addf %2, %5 : vector<8x32xf32>
    %c0_8 = arith.constant 0 : index
    %c0_9 = arith.constant 0 : index
    %7 = vector.load %arg5[%c0_8, %c0_9] : memref<1x32xf32, #tpu.memory_space<vmem>>, vector<1x32xf32>
    %8 = vector.broadcast %7 : vector<1x32xf32> to vector<8x32xf32>
    %9 = arith.addf %6, %8 : vector<8x32xf32>
    %cst_10 = arith.constant 0.000000e+00 : f32
    %10 = vector.broadcast %cst_10 : f32 to vector<8x32xf32>
    %11 = arith.maximumf %9, %10 : vector<8x32xf32>
    %12 = arith.truncf %11 : vector<8x32xf32> to vector<8x32xbf16>
    %c0_11 = arith.constant 0 : index
    %c0_12 = arith.constant 0 : index
    %13 = vector.load %arg6[%c0_11, %c0_12] : memref<32x32xbf16, #tpu.memory_space<vmem>>, vector<32x32xbf16>
    %cst_13 = arith.constant dense<0.000000e+00> : vector<8x32xf32>
    %14 = tpu.matmul %12, %13, %cst_13 {dimension_numbers = #tpu.dot_dimension_numbers<[1], [0], [0], [1], [0, 0, 1, 1], [], []>} : vector<8x32xbf16>, vector<32x32xbf16>, vector<8x32xf32> -> vector<8x32xf32>
    %c0_14 = arith.constant 0 : index
    %c0_15 = arith.constant 0 : index
    %15 = vector.load %arg7[%c0_14, %c0_15] : memref<1x32xf32, #tpu.memory_space<vmem>>, vector<1x32xf32>
    %16 = vector.broadcast %15 : vector<1x32xf32> to vector<8x32xf32>
    %17 = arith.addf %14, %16 : vector<8x32xf32>
    %cst_16 = arith.constant 0.000000e+00 : f32
    %18 = vector.broadcast %cst_16 : f32 to vector<8x32xf32>
    %19 = arith.maximumf %17, %18 : vector<8x32xf32>
    %20 = arith.truncf %19 : vector<8x32xf32> to vector<8x32xbf16>
    %c0_17 = arith.constant 0 : index
    %c0_18 = arith.constant 0 : index
    %21 = vector.load %arg8[%c0_17, %c0_18] : memref<32x8xbf16, #tpu.memory_space<vmem>>, vector<32x8xbf16>
    %cst_19 = arith.constant dense<0.000000e+00> : vector<8x8xf32>
    %22 = tpu.matmul %20, %21, %cst_19 {dimension_numbers = #tpu.dot_dimension_numbers<[1], [0], [0], [1], [0, 0, 1, 1], [], []>} : vector<8x32xbf16>, vector<32x8xbf16>, vector<8x8xf32> -> vector<8x8xf32>
    %c0_20 = arith.constant 0 : index
    %c0_21 = arith.constant 0 : index
    %23 = vector.load %arg9[%c0_20, %c0_21] : memref<1x8xf32, #tpu.memory_space<vmem>>, vector<1x8xf32>
    %24 = vector.broadcast %23 : vector<1x8xf32> to vector<8x8xf32>
    %25 = arith.addf %22, %24 : vector<8x8xf32>
    %c0_22 = arith.constant 0 : index
    %c0_23 = arith.constant 0 : index
    %26 = vector.load %arg10[%c0_22, %c0_23] : memref<8x8xf32, #tpu.memory_space<vmem>>, vector<8x8xf32>
    tpu.vector_store %arg10[%c0_22, %c0_23], %25 {strides = array<i32>} : memref<8x8xf32, #tpu.memory_space<vmem>>, vector<8x8xf32>,
    return
  }
  func.func @transform_0(%arg0: i32) -> (i32, i32) {
    %c0_i32 = arith.constant 0 : i32
    %c0_i32_0 = arith.constant 0 : i32
    return %arg0, %c0_i32 : i32, i32
  }
  func.func @transform_1(%arg0: i32) -> (i32, i32) {
    %c0_i32 = arith.constant 0 : i32
    %c0_i32_0 = arith.constant 0 : i32
    return %arg0, %c0_i32 : i32, i32
  }
  func.func @transform_2(%arg0: i32) -> (i32, i32) {
    %c0_i32 = arith.constant 0 : i32
    %c0_i32_0 = arith.constant 0 : i32
    %c0_i32_1 = arith.constant 0 : i32
    return %c0_i32, %c0_i32_0 : i32, i32
  }
  func.func @transform_3(%arg0: i32) -> (i32, i32) {
    %c0_i32 = arith.constant 0 : i32
    %c0_i32_0 = arith.constant 0 : i32
    %c0_i32_1 = arith.constant 0 : i32
    return %c0_i32, %c0_i32_0 : i32, i32
  }
  func.func @transform_4(%arg0: i32) -> (i32, i32) {
    %c0_i32 = arith.constant 0 : i32
    %c0_i32_0 = arith.constant 0 : i32
    %c0_i32_1 = arith.constant 0 : i32
    return %c0_i32, %c0_i32_0 : i32, i32
  }
  func.func @transform_5(%arg0: i32) -> (i32, i32) {
    %c0_i32 = arith.constant 0 : i32
    %c0_i32_0 = arith.constant 0 : i32
    %c0_i32_1 = arith.constant 0 : i32
    return %c0_i32, %c0_i32_0 : i32, i32
  }
  func.func @transform_6(%arg0: i32) -> (i32, i32) {
    %c0_i32 = arith.constant 0 : i32
    %c0_i32_0 = arith.constant 0 : i32
    %c0_i32_1 = arith.constant 0 : i32
    return %c0_i32, %c0_i32_0 : i32, i32
  }
  func.func @transform_7(%arg0: i32) -> (i32, i32) {
    %c0_i32 = arith.constant 0 : i32
    %c0_i32_0 = arith.constant 0 : i32
    %c0_i32_1 = arith.constant 0 : i32
    return %c0_i32, %c0_i32_0 : i32, i32
  }
  func.func @transform_8(%arg0: i32) -> (i32, i32) {
    %c0_i32 = arith.constant 0 : i32
    %c0_i32_0 = arith.constant 0 : i32
    %c0_i32_1 = arith.constant 0 : i32
    return %c0_i32, %c0_i32_0 : i32, i32
  }
  func.func @transform_9(%arg0: i32) -> (i32, i32) {
    %c0_i32 = arith.constant 0 : i32
    %c0_i32_0 = arith.constant 0 : i32
    return %arg0, %c0_i32 : i32, i32
  }
}

</mosaic_0001>

<llo_original>
// kernel: tpu_custom_call.1
$region0: #{tpu_custom_call.1}
  #allocation0 [shape = 'u32[]', space=smem, size = 0x4, offset = 0x4, fixed_abs, tag = 'smem constant byte address 0x4 - core index']
  #allocation1 [shape = 'u32[144,128]{1,0:T(1,128)}', space=vmem, size = 0x12000, scoped, tag = 'internal scratch']
  %s0 = inlined_call_operand.vmem [shape: bf16[32,8], index: 0, kind: input, shape index: {}]
  %s1 = inlined_call_operand.vmem [shape: bf16[32,4], index: 1, kind: input, shape index: {}]
  %s2 = inlined_call_operand.vmem [shape: bf16[8,32], index: 2, kind: input, shape index: {}]
  %s3 = inlined_call_operand.vmem [shape: bf16[4,32], index: 3, kind: input, shape index: {}]
  %s4 = inlined_call_operand.vmem [shape: f32[1,32], index: 4, kind: input, shape index: {}]
  %s5 = inlined_call_operand.vmem [shape: bf16[32,32], index: 5, kind: input, shape index: {}]
  %s6 = inlined_call_operand.vmem [shape: f32[1,32], index: 6, kind: input, shape index: {}]
  %s7 = inlined_call_operand.vmem [shape: bf16[32,8], index: 7, kind: input, shape index: {}]
  %s8 = inlined_call_operand.vmem [shape: f32[1,8], index: 8, kind: input, shape index: {}]
  %s9 = inlined_call_operand.vmem [shape: f32[32,8], index: 9, kind: output, shape index: {}]
  %s10 = sld [smem:[#allocation0]]
  $region69: #{tpu_custom_call.1} parent=0
    _
  %s12 = ssub.s32 1, %s10
  %s13 = scalar_select 0, %s12, %s10
  loop: start=0, step=1, limit=6
  $region2: #{tpu_custom_call.1} parent=0 // loop_pre_header
    _
  $region3: #{tpu_custom_call.1} parent=0 // loop_header
    %s15 = sphi 0, %s19
    %p16 = scmp.ge.s32.totalorder %s15, 6
    %s25 = sphi 0, %s27
    %s28 = sphi 0, %s25
    %s29 = sphi 0, %s28
    %s45 = sphi 0, %s29
    %s51 = sphi 0, %s53
    %s54 = sphi 0, %s51
    %s55 = sphi 0, %s54
    %s71 = sphi 0, %s55
    %s75 = sphi 0, %s75
    %s77 = sphi 0, %s75
    %s78 = sphi 0, %s77
    %s92 = sphi 0, %s78
    %s96 = sphi 0, %s96
    %s98 = sphi 0, %s96
    %s99 = sphi 0, %s98
    %s113 = sphi 0, %s99
    %s117 = sphi 0, %s117
    %s119 = sphi 0, %s117
    %s120 = sphi 0, %s119
    %s134 = sphi 0, %s120
    %s138 = sphi 0, %s138
    %s140 = sphi 0, %s138
    %s141 = sphi 0, %s140
    %s155 = sphi 0, %s141
    %s159 = sphi 0, %s159
    %s161 = sphi 0, %s159
    %s162 = sphi 0, %s161
    %s176 = sphi 0, %s162
    %s180 = sphi 0, %s180
    %s182 = sphi 0, %s180
    %s183 = sphi 0, %s182
    %s197 = sphi 0, %s183
    %s201 = sphi 0, %s201
    %s203 = sphi 0, %s201
    %s204 = sphi 0, %s203
    %s218 = sphi 0, %s204
    %s224 = sphi 0, %s226
    %s227 = sphi 0, %s224
    %s228 = sphi 0, %s227
    %s244 = sphi 0, %s228
  $region4: #{tpu_custom_call.1} parent=0 // loop_header_branch
    %18 = sbr.rel (%p16) target = $region8
  $region5: #{tpu_custom_call.1} parent=0 // loop_body
    %s20 = ssub.s32 %s15, 1
    %s21 = ssub.s32 %s15, 2
    %s22 = sadd.s32 %s15, 1
    %s23 = ssub.s32 %s15, %s22
    %p24 = scmp.eq.s32.totalorder %s23, 0
    %s26 = sadd.s32 %s25, 1
    %s27 = scalar_select %p24, %s25, %s26
    %p30 = pneg %p24
    %p31 = scmp.eq.s32.totalorder %s15, 3
    %p32 = por %p30, %p31
    %p33 = scmp.ne.s32.totalorder %s25, %s28
    %p34 = scmp.eq.s32.totalorder %s15, 0
    %p35 = por %p33, %p34
    %p36 = scmp.ne.s32.totalorder %s25, %s28
    %p37 = scmp.eq.s32.totalorder %s20, 3
    %p38 = por %p36, %p37
    %p39 = scmp.ne.s32.totalorder %s28, %s29
    %p40 = scmp.eq.s32.totalorder %s20, 0
    %p41 = por %p39, %p40
    %p42 = scmp.ne.s32.totalorder %s28, %s29
    %p43 = scmp.eq.s32.totalorder %s21, 3
    %p44 = por %p42, %p43
    %p46 = scmp.ne.s32.totalorder %s29, %s45
    %p47 = scmp.eq.s32.totalorder %s21, 0
    %p48 = por %p46, %p47
    %s49 = ssub.s32 %s15, %s22
    %p50 = scmp.eq.s32.totalorder %s49, 0
    %s52 = sadd.s32 %s51, 1
    %s53 = scalar_select %p50, %s51, %s52
    %p56 = pneg %p50
    %p57 = scmp.eq.s32.totalorder %s15, 3
    %p58 = por %p56, %p57
    %p59 = scmp.ne.s32.totalorder %s51, %s54
    %p60 = scmp.eq.s32.totalorder %s15, 0
    %p61 = por %p59, %p60
    %p62 = scmp.ne.s32.totalorder %s51, %s54
    %p63 = scmp.eq.s32.totalorder %s20, 3
    %p64 = por %p62, %p63
    %p65 = scmp.ne.s32.totalorder %s54, %s55
    %p66 = scmp.eq.s32.totalorder %s20, 0
    %p67 = por %p65, %p66
    %p68 = scmp.ne.s32.totalorder %s54, %s55
    %p69 = scmp.eq.s32.totalorder %s21, 3
    %p70 = por %p68, %p69
    %p72 = scmp.ne.s32.totalorder %s55, %s71
    %p73 = scmp.eq.s32.totalorder %s21, 0
    %p74 = por %p72, %p73
    %s76 = sadd.s32 %s75, 1
    %p79 = scmp.eq.s32.totalorder %s15, 3
    %p80 = scmp.ne.s32.totalorder %s75, %s77
    %p81 = scmp.eq.s32.totalorder %s15, 0
    %p82 = por %p80, %p81
    %p83 = scmp.ne.s32.totalorder %s75, %s77
    %p84 = scmp.eq.s32.totalorder %s20, 3
    %p85 = por %p83, %p84
    %p86 = scmp.ne.s32.totalorder %s77, %s78
    %p87 = scmp.eq.s32.totalorder %s20, 0
    %p88 = por %p86, %p87
    %p89 = scmp.ne.s32.totalorder %s77, %s78
    %p90 = scmp.eq.s32.totalorder %s21, 3
    %p91 = por %p89, %p90
    %p93 = scmp.ne.s32.totalorder %s78, %s92
    %p94 = scmp.eq.s32.totalorder %s21, 0
    %p95 = por %p93, %p94
    %s97 = sadd.s32 %s96, 1
    %p100 = scmp.eq.s32.totalorder %s15, 3
    %p101 = scmp.ne.s32.totalorder %s96, %s98
    %p102 = scmp.eq.s32.totalorder %s15, 0
    %p103 = por %p101, %p102
    %p104 = scmp.ne.s32.totalorder %s96, %s98
    %p105 = scmp.eq.s32.totalorder %s20, 3
    %p106 = por %p104, %p105
    %p107 = scmp.ne.s32.totalorder %s98, %s99
    %p108 = scmp.eq.s32.totalorder %s20, 0
    %p109 = por %p107, %p108
    %p110 = scmp.ne.s32.totalorder %s98, %s99
    %p111 = scmp.eq.s32.totalorder %s21, 3
    %p112 = por %p110, %p111
    %p114 = scmp.ne.s32.totalorder %s99, %s113
    %p115 = scmp.eq.s32.totalorder %s21, 0
    %p116 = por %p114, %p115
    %s118 = sadd.s32 %s117, 1
    %p121 = scmp.eq.s32.totalorder %s15, 3
    %p122 = scmp.ne.s32.totalorder %s117, %s119
    %p123 = scmp.eq.s32.totalorder %s15, 0
    %p124 = por %p122, %p123
    %p125 = scmp.ne.s32.totalorder %s117, %s119
    %p126 = scmp.eq.s32.totalorder %s20, 3
    %p127 = por %p125, %p126
    %p128 = scmp.ne.s32.totalorder %s119, %s120
    %p129 = scmp.eq.s32.totalorder %s20, 0
    %p130 = por %p128, %p129
    %p131 = scmp.ne.s32.totalorder %s119, %s120
    %p132 = scmp.eq.s32.totalorder %s21, 3
    %p133 = por %p131, %p132
    %p135 = scmp.ne.s32.totalorder %s120, %s134
    %p136 = scmp.eq.s32.totalorder %s21, 0
    %p137 = por %p135, %p136
    %s139 = sadd.s32 %s138, 1
    %p142 = scmp.eq.s32.totalorder %s15, 3
    %p143 = scmp.ne.s32.totalorder %s138, %s140
    %p144 = scmp.eq.s32.totalorder %s15, 0
    %p145 = por %p143, %p144
    %p146 = scmp.ne.s32.totalorder %s138, %s140
    %p147 = scmp.eq.s32.totalorder %s20, 3
    %p148 = por %p146, %p147
    %p149 = scmp.ne.s32.totalorder %s140, %s141
    %p150 = scmp.eq.s32.totalorder %s20, 0
    %p151 = por %p149, %p150
    %p152 = scmp.ne.s32.totalorder %s140, %s141
    %p153 = scmp.eq.s32.totalorder %s21, 3
    %p154 = por %p152, %p153
    %p156 = scmp.ne.s32.totalorder %s141, %s155
    %p157 = scmp.eq.s32.totalorder %s21, 0
    %p158 = por %p156, %p157
    %s160 = sadd.s32 %s159, 1
    %p163 = scmp.eq.s32.totalorder %s15, 3
    %p164 = scmp.ne.s32.totalorder %s159, %s161
    %p165 = scmp.eq.s32.totalorder %s15, 0
    %p166 = por %p164, %p165
    %p167 = scmp.ne.s32.totalorder %s159, %s161
    %p168 = scmp.eq.s32.totalorder %s20, 3
    %p169 = por %p167, %p168
    %p170 = scmp.ne.s32.totalorder %s161, %s162
    %p171 = scmp.eq.s32.totalorder %s20, 0
    %p172 = por %p170, %p171
    %p173 = scmp.ne.s32.totalorder %s161, %s162
    %p174 = scmp.eq.s32.totalorder %s21, 3
    %p175 = por %p173, %p174
    %p177 = scmp.ne.s32.totalorder %s162, %s176
    %p178 = scmp.eq.s32.totalorder %s21, 0
    %p179 = por %p177, %p178
    %s181 = sadd.s32 %s180, 1
    %p184 = scmp.eq.s32.totalorder %s15, 3
    %p185 = scmp.ne.s32.totalorder %s180, %s182
    %p186 = scmp.eq.s32.totalorder %s15, 0
    %p187 = por %p185, %p186
    %p188 = scmp.ne.s32.totalorder %s180, %s182
    %p189 = scmp.eq.s32.totalorder %s20, 3
    %p190 = por %p188, %p189
    %p191 = scmp.ne.s32.totalorder %s182, %s183
    %p192 = scmp.eq.s32.totalorder %s20, 0
    %p193 = por %p191, %p192
    %p194 = scmp.ne.s32.totalorder %s182, %s183
    %p195 = scmp.eq.s32.totalorder %s21, 3
    %p196 = por %p194, %p195
    %p198 = scmp.ne.s32.totalorder %s183, %s197
    %p199 = scmp.eq.s32.totalorder %s21, 0
    %p200 = por %p198, %p199
    %s202 = sadd.s32 %s201, 1
    %p205 = scmp.eq.s32.totalorder %s15, 3
    %p206 = scmp.ne.s32.totalorder %s201, %s203
    %p207 = scmp.eq.s32.totalorder %s15, 0
    %p208 = por %p206, %p207
    %p209 = scmp.ne.s32.totalorder %s201, %s203
    %p210 = scmp.eq.s32.totalorder %s20, 3
    %p211 = por %p209, %p210
    %p212 = scmp.ne.s32.totalorder %s203, %s204
    %p213 = scmp.eq.s32.totalorder %s20, 0
    %p214 = por %p212, %p213
    %p215 = scmp.ne.s32.totalorder %s203, %s204
    %p216 = scmp.eq.s32.totalorder %s21, 3
    %p217 = por %p215, %p216
    %p219 = scmp.ne.s32.totalorder %s204, %s218
    %p220 = scmp.eq.s32.totalorder %s21, 0
    %p221 = por %p219, %p220
    %s222 = ssub.s32 %s15, %s22
    %p223 = scmp.eq.s32.totalorder %s222, 0
    %s225 = sadd.s32 %s224, 1
    %s226 = scalar_select %p223, %s224, %s225
    %p229 = pneg %p223
    %p230 = scmp.eq.s32.totalorder %s15, 3
    %p231 = por %p229, %p230
    %p232 = scmp.ne.s32.totalorder %s224, %s227
    %p233 = scmp.eq.s32.totalorder %s15, 0
    %p234 = por %p232, %p233
    %p235 = scmp.ne.s32.totalorder %s224, %s227
    %p236 = scmp.eq.s32.totalorder %s20, 3
    %p237 = por %p235, %p236
    %p238 = scmp.ne.s32.totalorder %s227, %s228
    %p239 = scmp.eq.s32.totalorder %s20, 0
    %p240 = por %p238, %p239
    %p241 = scmp.ne.s32.totalorder %s227, %s228
    %p242 = scmp.eq.s32.totalorder %s21, 3
    %p243 = por %p241, %p242
    %p245 = scmp.ne.s32.totalorder %s228, %s244
    %p246 = scmp.eq.s32.totalorder %s21, 0
    %p247 = por %p245, %p246
    %p248 = scmp.le.s32.totalorder 1, %s15
    %p249 = scmp.lt.s32.totalorder %s15, 5
    %p250 = pnand %p248, %p249
    %p251 = pneg %p250
    // Predicated region
    $region9: #{tpu_custom_call.1} parent=5 // pred_check
      _
    $region10: #{tpu_custom_call.1} parent=5 // pred_check_branch
      %253 = sbr.rel (%p250) target = $region12
    $region11: #{tpu_custom_call.1} parent=5 // pred_region
      %s254 = ssub.s32 %s15, 1
      // Predicated region
      $region13: #{tpu_custom_call.1} parent=11 // pred_check
        %p255 = pneg %p88
      $region14: #{tpu_custom_call.1} parent=11 // pred_check_branch
        %257 = sbr.rel (%p255) target = $region16
      $region15: #{tpu_custom_call.1} parent=11 // pred_region
        _
      $region16: #{tpu_custom_call.1} parent=11 // pred_fallthru
        _
      // Predicated region
      $region17: #{tpu_custom_call.1} parent=11 // pred_check
        %p258 = pneg %p109
      $region18: #{tpu_custom_call.1} parent=11 // pred_check_branch
        %260 = sbr.rel (%p258) target = $region20
      $region19: #{tpu_custom_call.1} parent=11 // pred_region
        _
      $region20: #{tpu_custom_call.1} parent=11 // pred_fallthru
        _
      // Predicated region
      $region21: #{tpu_custom_call.1} parent=11 // pred_check
        %p261 = pneg %p130
      $region22: #{tpu_custom_call.1} parent=11 // pred_check_branch
        %263 = sbr.rel (%p261) target = $region24
      $region23: #{tpu_custom_call.1} parent=11 // pred_region
        _
      $region24: #{tpu_custom_call.1} parent=11 // pred_fallthru
        _
      // Predicated region
      $region25: #{tpu_custom_call.1} parent=11 // pred_check
        %p264 = pneg %p151
      $region26: #{tpu_custom_call.1} parent=11 // pred_check_branch
        %266 = sbr.rel (%p264) target = $region28
      $region27: #{tpu_custom_call.1} parent=11 // pred_region
        _
      $region28: #{tpu_custom_call.1} parent=11 // pred_fallthru
        _
      // Predicated region
      $region29: #{tpu_custom_call.1} parent=11 // pred_check
        %p267 = pneg %p172
      $region30: #{tpu_custom_call.1} parent=11 // pred_check_branch
        %269 = sbr.rel (%p267) target = $region32
      $region31: #{tpu_custom_call.1} parent=11 // pred_region
        _
      $region32: #{tpu_custom_call.1} parent=11 // pred_fallthru
        _
      // Predicated region
      $region33: #{tpu_custom_call.1} parent=11 // pred_check
        %p270 = pneg %p193
      $region34: #{tpu_custom_call.1} parent=11 // pred_check_branch
        %272 = sbr.rel (%p270) target = $region36
      $region35: #{tpu_custom_call.1} parent=11 // pred_region
        _
      $region36: #{tpu_custom_call.1} parent=11 // pred_fallthru
        _
      // Predicated region
      $region37: #{tpu_custom_call.1} parent=11 // pred_check
        %p273 = pneg %p214
      $region38: #{tpu_custom_call.1} parent=11 // pred_check_branch
        %275 = sbr.rel (%p273) target = $region40
      $region39: #{tpu_custom_call.1} parent=11 // pred_region
        _
      $region40: #{tpu_custom_call.1} parent=11 // pred_fallthru
        _
    $region12: #{tpu_custom_call.1} parent=5 // pred_fallthru
      _
    %p276 = scmp.lt.s32.totalorder %s15, 4
    // Predicated region
    $region41: #{tpu_custom_call.1} parent=5 // pred_check
      %p277 = pneg %p276
    $region42: #{tpu_custom_call.1} parent=5 // pred_check_branch
      %279 = sbr.rel (%p277) target = $region44
    $region43: #{tpu_custom_call.1} parent=5 // pred_region
      // Predicated region
      $region45: #{tpu_custom_call.1} parent=43 // pred_check
        %p280 = pneg %p35
      $region46: #{tpu_custom_call.1} parent=43 // pred_check_branch
        %282 = sbr.rel (%p280) target = $region48
      $region47: #{tpu_custom_call.1} parent=43 // pred_region
        %p283 = scmp.lt.s32.totalorder %s15, 3
        %s284 = scalar_select %p283, %s15, 3
        %s285 = smul.addr %s284, 4
        %s286 = scalar_lea.vmem %s0, %s285
      $region48: #{tpu_custom_call.1} parent=43 // pred_fallthru
        _
      // Predicated region
      $region49: #{tpu_custom_call.1} parent=43 // pred_check
        %p287 = pneg %p61
      $region50: #{tpu_custom_call.1} parent=43 // pred_check_branch
        %289 = sbr.rel (%p287) target = $region52
      $region51: #{tpu_custom_call.1} parent=43 // pred_region
        %p290 = scmp.lt.s32.totalorder %s15, 3
        %s291 = scalar_select %p290, %s15, 3
        %s292 = smul.addr %s291, 4
        %s293 = scalar_lea.vmem %s1, %s292
      $region52: #{tpu_custom_call.1} parent=43 // pred_fallthru
        _
    $region44: #{tpu_custom_call.1} parent=5 // pred_fallthru
      _
    %p294 = scmp.le.s32.totalorder 1, %s15
    %p295 = scmp.lt.s32.totalorder %s15, 5
    %p296 = pnand %p294, %p295
    %p297 = pneg %p296
    // Predicated region
    $region53: #{tpu_custom_call.1} parent=5 // pred_check
      _
    $region54: #{tpu_custom_call.1} parent=5 // pred_check_branch
      %299 = sbr.rel (%p296) target = $region56
    $region55: #{tpu_custom_call.1} parent=5 // pred_region
      %s300 = ssub.s32 %s15, 1
      %p301 = scmp.lt.s32.totalorder %s20, 3
      %s302 = scalar_select %p301, %s20, 3
      %s303 = smul.addr %s302, 4
      %s304 = scalar_lea.vmem %s0, %s303
      %p305 = pneg %p41
      %p306 = pneg %p38
      %p307 = scmp.lt.s32.totalorder %s20, 3
      %s308 = scalar_select %p307, %s20, 3
      %s309 = smul.addr %s308, 4
      %s310 = scalar_lea.vmem %s1, %s309
      %p311 = pneg %p67
      %p312 = pneg %p64
      %p313 = pneg %p88
      %p314 = pneg %p85
      %p315 = pneg %p109
      %p316 = pneg %p106
      %p317 = pneg %p130
      %p318 = pneg %p127
      %p319 = pneg %p151
      %p320 = pneg %p148
      %p321 = pneg %p172
      %p322 = pneg %p169
      %p323 = pneg %p193
      %p324 = pneg %p190
      %p325 = pneg %p214
      %p326 = pneg %p211
      %p327 = pneg %p240
      %p328 = pneg %p237
      %p329 = scmp.lt.s32.totalorder %s20, 3
      %s330 = scalar_select %p329, %s20, 3
      %s331 = smul.addr %s330, 8
      %s332 = scalar_lea.vmem %s9, %s331
      %p333 = scmp.lt.s32.totalorder %s20, 3
      %s334 = scalar_select %p333, %s20, 3
      %s335 = smul.addr %s334, 4
      %s336 = scalar_lea.vmem %s0, %s335
      %p337 = scmp.lt.s32.totalorder %s20, 3
      %s338 = scalar_select %p337, %s20, 3
      %s339 = smul.addr %s338, 4
      %s340 = scalar_lea.vmem %s1, %s339
      %p341 = scmp.lt.s32.totalorder %s20, 3
      %s342 = scalar_select %p341, %s20, 3
      %s343 = smul.addr %s342, 8
      %s344 = scalar_lea.vmem %s9, %s343
      %v346 = vld [vmem:[%s336] sm:$0xf]
      %v347 = vld [vmem:[%s2] sm:$0xf]
      %v348 = vld [vmem:[%s340] sm:$0xf]
      %v349 = vld [vmem:[%s3] sm:$0x3]
      %vm350 = vcmask 31744
      %v352 = vsel %vm350, %v348, 0
      %vm354 = vcmask 1041408
      %v356 = vsel %vm354, %v349, 0
      %358 = vmatprep.subr.bf16.mxu0 0
      %359 = vmatpush1.bf16.msra.mxu0 %v356
      %360 = vmatprep.subr.bf16.mxu0 0
      %361 = vmatpush1.bf16.msra.mxu0 0
      %362 = vmatprep.subr.bf16.mxu0 0
      %363 = vmatpush1.bf16.msra.mxu0 0
      %364 = vmatprep.subr.bf16.mxu0 0
      %365 = vmatpush1.bf16.msra.mxu0 0
      %366 = vmatprep.subr.bf16.mxu0 0
      %367 = vmatpush1.bf16.msra.mxu0 0
      %368 = vmatprep.subr.bf16.mxu0 0
      %369 = vmatpush1.bf16.msra.mxu0 0
      %370 = vmatprep.subr.bf16.mxu0 0
      %371 = vmatpush1.bf16.msra.mxu0 0
      %372 = vmatprep.subr.bf16.mxu0 0
      %373 = vmatpush1.bf16.msra.mxu0 0
      %374 = vmatprep.subr.bf16.mxu0 0
      %375 = vmatpush1.bf16.msra.mxu0 0
      %376 = vmatprep.subr.bf16.mxu0 0
      %377 = vmatpush1.bf16.msra.mxu0 0
      %378 = vmatprep.subr.bf16.mxu0 0
      %379 = vmatpush1.bf16.msra.mxu0 0
      %380 = vmatprep.subr.bf16.mxu0 0
      %381 = vmatpush1.bf16.msra.mxu0 0
      %382 = vmatprep.subr.bf16.mxu0 0
      %383 = vmatpush1.bf16.msra.mxu0 0
      %384 = vmatprep.subr.bf16.mxu0 0
      %385 = vmatpush1.bf16.msra.mxu0 0
      %386 = vmatprep.subr.bf16.mxu0 0
      %387 = vmatpush1.bf16.msra.mxu0 0
      %388 = vmatprep.subr.bf16.mxu0 0
      %389 = vmatpush1.bf16.msra.mxu0 0
      %390 = vmatprep.mubr.bf16.mxu0 0
      %391 = vmatmul.mubr.bf16.gmra.mrb[0].mxu0 %v352
      %v392 = vpop.f32.mrb[0].mxu0
      %v393 = vadd.f32 0.0, %v392
      %v394 = vpop.f32.mrb[0].mxu0
      %v395 = vpop.f32.mrb[0].mxu0
      %v396 = vpop.f32.mrb[0].mxu0
      %397 = vdwg.mxu0
      %vm398 = vcmask 64512
      %v400 = vsel %vm398, %v346, 0
      %vm402 = vcmask 1043456
      %v404 = vsel %vm402, %v347, 0
      %406 = vmatprep.subr.bf16.mxu0 0
      %407 = vmatpush1.bf16.msra.mxu0 %v404
      %408 = vmatprep.subr.bf16.mxu0 0
      %409 = vmatpush1.bf16.msra.mxu0 0
      %410 = vmatprep.subr.bf16.mxu0 0
      %411 = vmatpush1.bf16.msra.mxu0 0
      %412 = vmatprep.subr.bf16.mxu0 0
      %413 = vmatpush1.bf16.msra.mxu0 0
      %414 = vmatprep.subr.bf16.mxu0 0
      %415 = vmatpush1.bf16.msra.mxu0 0
      %416 = vmatprep.subr.bf16.mxu0 0
      %417 = vmatpush1.bf16.msra.mxu0 0
      %418 = vmatprep.subr.bf16.mxu0 0
      %419 = vmatpush1.bf16.msra.mxu0 0
      %420 = vmatprep.subr.bf16.mxu0 0
      %421 = vmatpush1.bf16.msra.mxu0 0
      %422 = vmatprep.subr.bf16.mxu0 0
      %423 = vmatpush1.bf16.msra.mxu0 0
      %424 = vmatprep.subr.bf16.mxu0 0
      %425 = vmatpush1.bf16.msra.mxu0 0
      %426 = vmatprep.subr.bf16.mxu0 0
      %427 = vmatpush1.bf16.msra.mxu0 0
      %428 = vmatprep.subr.bf16.mxu0 0
      %429 = vmatpush1.bf16.msra.mxu0 0
      %430 = vmatprep.subr.bf16.mxu0 0
      %431 = vmatpush1.bf16.msra.mxu0 0
      %432 = vmatprep.subr.bf16.mxu0 0
      %433 = vmatpush1.bf16.msra.mxu0 0
      %434 = vmatprep.subr.bf16.mxu0 0
      %435 = vmatpush1.bf16.msra.mxu0 0
      %436 = vmatprep.subr.bf16.mxu0 0
      %437 = vmatpush1.bf16.msra.mxu0 0
      %438 = vmatprep.mubr.bf16.mxu0 0
      %439 = vmatmul.mubr.bf16.gmra.mrb[0].mxu0 %v400
      %v440 = vpop.f32.mrb[0].mxu0
      %v441 = vadd.f32 %v393, %v440
      %v442 = vpop.f32.mrb[0].mxu0
      %v443 = vpop.f32.mrb[0].mxu0
      %v444 = vpop.f32.mrb[0].mxu0
      %445 = vdwg.mxu0
      %v446 = vld [vmem:[%s4] sm:$0x1]
      %v448 = vlaneseq
      %v449 = vshrl.u32 %v448, 7
      %v450 = vsub.s32 0, %v449
      %v451 = vrot.slane %v446, %v450
      %v453 = vadd.f32 %v441, %v451
      %v454 = vmax.f32 %v453, 0.0
      %v455 = vpack.c.bf16 %v454, %v454
      %v456 = vld [vmem:[%s5] sm:$0xf]
      %v457 = vld [vmem:[%s5 + $0x4] sm:$0xf]
      %v458 = vld [vmem:[%s5 + $0x8] sm:$0xf]
      %v459 = vld [vmem:[%s5 + $0xc] sm:$0xf]
      %v460 = vld [vmem:[%s6] sm:$0x1]
      %v462 = vlaneseq
      %v463 = vshrl.u32 %v462, 7
      %v464 = vsub.s32 0, %v463
      %v465 = vrot.slane %v460, %v464
      %v471 = vunpack.c.l.b16 %v456
      %v472 = vunpack.c.l.b16 %v457
      %v473 = vunpack.c.l.b16 %v458
      %v474 = vunpack.c.l.b16 %v459
      %v475 = vpack.c.b16 %v472, %v471
      %v476 = vpack.c.b16 %v474, %v473
      %vm479 = vcmask 261120
      %v481 = vsel %vm479, %v455, 0
      %483 = vmatprep.subr.bf16.mxu0 0
      %484 = vmatpush1.bf16.msra.mxu0 %v475
      %485 = vmatprep.subr.bf16.mxu0 0
      %486 = vmatpush1.bf16.msra.mxu0 %v476
      %487 = vmatprep.subr.bf16.mxu0 0
      %488 = vmatpush1.bf16.msra.mxu0 0
      %489 = vmatprep.subr.bf16.mxu0 0
      %490 = vmatpush1.bf16.msra.mxu0 0
      %491 = vmatprep.subr.bf16.mxu0 0
      %492 = vmatpush1.bf16.msra.mxu0 0
      %493 = vmatprep.subr.bf16.mxu0 0
      %494 = vmatpush1.bf16.msra.mxu0 0
      %495 = vmatprep.subr.bf16.mxu0 0
      %496 = vmatpush1.bf16.msra.mxu0 0
      %497 = vmatprep.subr.bf16.mxu0 0
      %498 = vmatpush1.bf16.msra.mxu0 0
      %499 = vmatprep.subr.bf16.mxu0 0
      %500 = vmatpush1.bf16.msra.mxu0 0
      %501 = vmatprep.subr.bf16.mxu0 0
      %502 = vmatpush1.bf16.msra.mxu0 0
      %503 = vmatprep.subr.bf16.mxu0 0
      %504 = vmatpush1.bf16.msra.mxu0 0
      %505 = vmatprep.subr.bf16.mxu0 0
      %506 = vmatpush1.bf16.msra.mxu0 0
      %507 = vmatprep.subr.bf16.mxu0 0
      %508 = vmatpush1.bf16.msra.mxu0 0
      %509 = vmatprep.subr.bf16.mxu0 0
      %510 = vmatpush1.bf16.msra.mxu0 0
      %511 = vmatprep.subr.bf16.mxu0 0
      %512 = vmatpush1.bf16.msra.mxu0 0
      %513 = vmatprep.subr.bf16.mxu0 0
      %514 = vmatpush1.bf16.msra.mxu0 0
      %515 = vmatprep.mubr.bf16.mxu0 0
      %516 = vmatmul.mubr.bf16.gmra.mrb[0].mxu0 %v481
      %v517 = vpop.f32.mrb[0].mxu0
      %v518 = vadd.f32 %v465, %v517
      %v519 = vpop.f32.mrb[0].mxu0
      %v520 = vpop.f32.mrb[0].mxu0
      %v521 = vpop.f32.mrb[0].mxu0
      %522 = vdwg.mxu0
      %v523 = vmax.f32 %v518, 0.0
      %v524 = vpack.c.bf16 %v523, %v523
      %v525 = vld [vmem:[%s7] sm:$0xf]
      %v526 = vld [vmem:[%s7 + $0x4] sm:$0xf]
      %v527 = vld [vmem:[%s7 + $0x8] sm:$0xf]
      %v528 = vld [vmem:[%s7 + $0xc] sm:$0xf]
      %v529 = vld [vmem:[%s8] sm:$0x1]
      %v531 = vlaneseq
      %v532 = vshrl.u32 %v531, 7
      %v533 = vsub.s32 0, %v532
      %v534 = vrot.slane %v529, %v533
      %v540 = vunpack.c.l.b16 %v525
      %v541 = vunpack.c.l.b16 %v526
      %v542 = vunpack.c.l.b16 %v527
      %v543 = vunpack.c.l.b16 %v528
      %v544 = vpack.c.b16 %v541, %v540
      %v545 = vpack.c.b16 %v543, %v542
      %v549 = vsel %vm479, %v524, 0
      %551 = vmatprep.subr.bf16.mxu0 0
      %552 = vmatpush1.bf16.msra.mxu0 %v544
      %553 = vmatprep.subr.bf16.mxu0 0
      %554 = vmatpush1.bf16.msra.mxu0 %v545
      %555 = vmatprep.subr.bf16.mxu0 0
      %556 = vmatpush1.bf16.msra.mxu0 0
      %557 = vmatprep.subr.bf16.mxu0 0
      %558 = vmatpush1.bf16.msra.mxu0 0
      %559 = vmatprep.subr.bf16.mxu0 0
      %560 = vmatpush1.bf16.msra.mxu0 0
      %561 = vmatprep.subr.bf16.mxu0 0
      %562 = vmatpush1.bf16.msra.mxu0 0
      %563 = vmatprep.subr.bf16.mxu0 0
      %564 = vmatpush1.bf16.msra.mxu0 0
      %565 = vmatprep.subr.bf16.mxu0 0
      %566 = vmatpush1.bf16.msra.mxu0 0
      %567 = vmatprep.subr.bf16.mxu0 0
      %568 = vmatpush1.bf16.msra.mxu0 0
      %569 = vmatprep.subr.bf16.mxu0 0
      %570 = vmatpush1.bf16.msra.mxu0 0
      %571 = vmatprep.subr.bf16.mxu0 0
      %572 = vmatpush1.bf16.msra.mxu0 0
      %573 = vmatprep.subr.bf16.mxu0 0
      %574 = vmatpush1.bf16.msra.mxu0 0
      %575 = vmatprep.subr.bf16.mxu0 0
      %576 = vmatpush1.bf16.msra.mxu0 0
      %577 = vmatprep.subr.bf16.mxu0 0
      %578 = vmatpush1.bf16.msra.mxu0 0
      %579 = vmatprep.subr.bf16.mxu0 0
      %580 = vmatpush1.bf16.msra.mxu0 0
      %581 = vmatprep.subr.bf16.mxu0 0
      %582 = vmatpush1.bf16.msra.mxu0 0
      %583 = vmatprep.mubr.bf16.mxu0 0
      %584 = vmatmul.mubr.bf16.gmra.mrb[0].mxu0 %v549
      %v585 = vpop.f32.mrb[0].mxu0
      %v586 = vadd.f32 %v534, %v585
      %v587 = vpop.f32.mrb[0].mxu0
      %v588 = vpop.f32.mrb[0].mxu0
      %v589 = vpop.f32.mrb[0].mxu0
      %590 = vdwg.mxu0
      %591 = vst.msk [vmem:[%s344] sm:$0xff] %vm398, %v586
      %p592 = scmp.lt.s32.totalorder %s20, 3
      %s593 = scalar_select %p592, %s20, 3
      %s594 = smul.addr %s593, 8
      %s595 = scalar_lea.vmem %s9, %s594
      // Predicated region
      $region57: #{tpu_custom_call.1} parent=55 // pred_check
        %p596 = pneg %p237
      $region58: #{tpu_custom_call.1} parent=55 // pred_check_branch
        %598 = sbr.rel (%p596) target = $region60
      $region59: #{tpu_custom_call.1} parent=55 // pred_region
        _
      $region60: #{tpu_custom_call.1} parent=55 // pred_fallthru
        _
    $region56: #{tpu_custom_call.1} parent=5 // pred_fallthru
      _
    %p599 = scmp.le.s32.totalorder 2, %s15
    // Predicated region
    $region61: #{tpu_custom_call.1} parent=5 // pred_check
      %p600 = pneg %p599
    $region62: #{tpu_custom_call.1} parent=5 // pred_check_branch
      %602 = sbr.rel (%p600) target = $region64
    $region63: #{tpu_custom_call.1} parent=5 // pred_region
      %s603 = ssub.s32 %s15, 2
      // Predicated region
      $region65: #{tpu_custom_call.1} parent=63 // pred_check
        %p604 = pneg %p243
      $region66: #{tpu_custom_call.1} parent=63 // pred_check_branch
        %606 = sbr.rel (%p604) target = $region68
      $region67: #{tpu_custom_call.1} parent=63 // pred_region
        %p607 = scmp.lt.s32.totalorder %s21, 3
        %s608 = scalar_select %p607, %s21, 3
        %s609 = smul.addr %s608, 8
        %s610 = scalar_lea.vmem %s9, %s609
      $region68: #{tpu_custom_call.1} parent=63 // pred_fallthru
        _
    $region64: #{tpu_custom_call.1} parent=5 // pred_fallthru
      _
  $region6: #{tpu_custom_call.1} parent=0 // loop_footer
    %s19 = sadd.s32 1, %s15
  $region7: #{tpu_custom_call.1} parent=0 // loop_footer_branch
    %14 = sbr.rel target = $region3
  $region8: #{tpu_custom_call.1} parent=0 // loop_exit
    _

</llo_original>
